<compile_context>
chip_gen: v7x
topology: tpu7x:2x2x1
jax: 0.10.0
libtpu: 0.0.40
codegen_flags: <defaults>
</compile_context>

<pallas_src>
import functools

import jax
import jax.numpy as jnp
from jax import lax
from jax.experimental import pallas as pl
from jax.experimental.pallas import tpu as pltpu


def bert_self_output_kernel(
    h_ref,       # (TM, H) f32   hidden_states rows
    x_ref,       # (TM, H) f32   input_tensor rows (residual)
    w_ref,       # (H,  H) bf16  dense weight, pre-transposed to [in, out]
    b_ref,       # (1,  H) f32   dense bias
    gamma_ref,   # (1,  H) f32   LayerNorm weight
    beta_ref,    # (1,  H) f32   LayerNorm bias
    o_ref,       # (TM, H) f32
    *,
    eps: float,
):
    # Dense projection on the MXU (bf16 operands, f32 accumulation).
    h_bf16 = h_ref[...].astype(jnp.bfloat16)
    out = jnp.dot(h_bf16, w_ref[...],
                  preferred_element_type=jnp.float32) + b_ref[...]
    # TODO(synk): hidden dropout omitted (eval-mode identity).

    # Residual add + TF-style LayerNorm (epsilon inside the sqrt), all f32.
    res = out + x_ref[...]
    u = jnp.mean(res, axis=-1, keepdims=True)
    d = res - u
    s = jnp.mean(d * d, axis=-1, keepdims=True)
    xhat = d * lax.rsqrt(s + eps)                  # EUP rsqrt
    o_ref[...] = gamma_ref[...] * xhat + beta_ref[...]


def bert_self_output(hidden_states, input_tensor, params, *, eps=1e-12,
                     row_tile=None):
    """hidden_states, input_tensor: [B, S, H] f32.

    params: {"w": [H, H] (PyTorch [out, in]), "b": [H], "ln_w": [H], "ln_b": [H]}
    """
    B, S, H = hidden_states.shape
    M = B * S

    # Pick the largest row tile that evenly divides M (fallback: whole thing).
    if row_tile is None:
        for cand in (512, 256, 128):
            if M >= cand and M % cand == 0:
                row_tile = cand
                break
        else:
            row_tile = M
    if M % row_tile != 0:
        row_tile = M
    n_rows = M // row_tile

    h2 = hidden_states.reshape(M, H)
    x2 = input_tensor.reshape(M, H)
    w = params["w"].T.astype(jnp.bfloat16)                 # (H, H) [in, out]
    b = params["b"].reshape(1, H).astype(jnp.float32)
    gamma = params["ln_w"].reshape(1, H).astype(jnp.float32)
    beta = params["ln_b"].reshape(1, H).astype(jnp.float32)

    row_spec = pl.BlockSpec((row_tile, H), lambda i: (i, 0))
    const_spec = lambda shape: pl.BlockSpec(shape, lambda i: (0, 0))

    kernel = functools.partial(bert_self_output_kernel, eps=eps)

    out = pl.pallas_call(
        kernel,
        out_shape=jax.ShapeDtypeStruct((M, H), jnp.float32),
        grid_spec=pltpu.PrefetchScalarGridSpec(
            num_scalar_prefetch=0,
            grid=(n_rows,),
            in_specs=[
                row_spec,                  # hidden_states rows
                row_spec,                  # input_tensor rows
                const_spec((H, H)),        # dense weight (resident)
                const_spec((1, H)),        # dense bias
                const_spec((1, H)),        # LN gamma
                const_spec((1, H)),        # LN beta
            ],
            out_specs=row_spec,
        ),
        compiler_params=pltpu.CompilerParams(
            dimension_semantics=("parallel",)),
    )(h2, x2, w, b, gamma, beta)

    return out.reshape(B, S, H)


def bert_self_output_reference(hidden_states, input_tensor, params, *, eps=1e-12):
    """Pure-JAX f32 reference mirroring the PyTorch forward (eval mode)."""
    out = jnp.einsum("bsh,oh->bso", hidden_states, params["w"]) + params["b"]
    res = out + input_tensor
    u = res.mean(-1, keepdims=True)
    s = ((res - u) ** 2).mean(-1, keepdims=True)
    xhat = (res - u) / jnp.sqrt(s + eps)
    return params["ln_w"] * xhat + params["ln_b"]


if __name__ == "__main__":
    B, S, H = 2, 16, 32

    key = jax.random.PRNGKey(0)
    ks = jax.random.split(key, 6)
    scale = 0.05
    params = {
        "w": scale * jax.random.normal(ks[0], (H, H), jnp.float32),
        "b": scale * jax.random.normal(ks[1], (H,), jnp.float32),
        "ln_w": jnp.ones((H,), jnp.float32),
        "ln_b": jnp.zeros((H,), jnp.float32),
    }

    hidden_states = jax.random.normal(ks[2], (B, S, H), jnp.float32)
    input_tensor = jax.random.normal(ks[3], (B, S, H), jnp.float32)

    out = bert_self_output(hidden_states, input_tensor, params)
    out = jax.block_until_ready(out)

    ref = bert_self_output_reference(hidden_states, input_tensor, params)
    assert out.shape == (B, S, H)
    # bf16 MXU operands -> loosened tolerance vs f32 reference
    assert jnp.allclose(out, ref, atol=2e-2, rtol=2e-2), \
        f"max abs err {jnp.max(jnp.abs(out - ref))}"

    print("KERNEL_OK")
</pallas_src>

<mosaic_0001>
module attributes {stable_mosaic.version = 11 : i64} {
  func.func @bert_self_output_kernel(%arg0: i32, %arg1: memref<32x32xf32, #tpu.memory_space<vmem>>, %arg2: memref<32x32xf32, #tpu.memory_space<vmem>>, %arg3: memref<32x32xbf16, #tpu.memory_space<vmem>>, %arg4: memref<1x32xf32, #tpu.memory_space<vmem>>, %arg5: memref<1x32xf32, #tpu.memory_space<vmem>>, %arg6: memref<1x32xf32, #tpu.memory_space<vmem>>, %arg7: memref<32x32xf32, #tpu.memory_space<vmem>>) attributes {dimension_semantics = [#tpu.dimension_semantics<parallel>], iteration_bounds = array<i64: 1>, scalar_prefetch = 0 : i64, scratch_operands = 0 : i64, tpu.core_type = #tpu.core_type<tc>, window_params = [{transform_indices = @transform_0, window_bounds = array<i64: 32, 32>}, {transform_indices = @transform_1, window_bounds = array<i64: 32, 32>}, {pipeline_mode = #tpu.pipeline_mode<synchronous>, transform_indices = @transform_2, window_bounds = array<i64: 32, 32>}, {pipeline_mode = #tpu.pipeline_mode<synchronous>, transform_indices = @transform_3, window_bounds = array<i64: 1, 32>}, {pipeline_mode = #tpu.pipeline_mode<synchronous>, transform_indices = @transform_4, window_bounds = array<i64: 1, 32>}, {pipeline_mode = #tpu.pipeline_mode<synchronous>, transform_indices = @transform_5, window_bounds = array<i64: 1, 32>}, {transform_indices = @transform_6, window_bounds = array<i64: 32, 32>}]} {
    %c0 = arith.constant 0 : index
    %c0_0 = arith.constant 0 : index
    %0 = vector.load %arg1[%c0, %c0_0] : memref<32x32xf32, #tpu.memory_space<vmem>>, vector<32x32xf32>
    %1 = arith.truncf %0 : vector<32x32xf32> to vector<32x32xbf16>
    %c0_1 = arith.constant 0 : index
    %c0_2 = arith.constant 0 : index
    %2 = vector.load %arg3[%c0_1, %c0_2] : memref<32x32xbf16, #tpu.memory_space<vmem>>, vector<32x32xbf16>
    %cst = arith.constant dense<0.000000e+00> : vector<32x32xf32>
    %3 = tpu.matmul %1, %2, %cst {dimension_numbers = #tpu.dot_dimension_numbers<[1], [0], [0], [1], [0, 0, 1, 1], [], []>} : vector<32x32xbf16>, vector<32x32xbf16>, vector<32x32xf32> -> vector<32x32xf32>
    %c0_3 = arith.constant 0 : index
    %c0_4 = arith.constant 0 : index
    %4 = vector.load %arg4[%c0_3, %c0_4] : memref<1x32xf32, #tpu.memory_space<vmem>>, vector<1x32xf32>
    %5 = vector.broadcast %4 : vector<1x32xf32> to vector<32x32xf32>
    %6 = arith.addf %3, %5 : vector<32x32xf32>
    %c0_5 = arith.constant 0 : index
    %c0_6 = arith.constant 0 : index
    %7 = vector.load %arg2[%c0_5, %c0_6] : memref<32x32xf32, #tpu.memory_space<vmem>>, vector<32x32xf32>
    %8 = arith.addf %6, %7 : vector<32x32xf32>
    %cst_7 = arith.constant dense<0.000000e+00> : vector<32xf32>
    %9 = vector.multi_reduction <add>, %8, %cst_7 [1] : vector<32x32xf32> to vector<32xf32>
    %10 = vector.shape_cast %9 : vector<32xf32> to vector<32x1xf32>
    %cst_8 = arith.constant 3.200000e+01 : f32
    %11 = vector.broadcast %cst_8 : f32 to vector<32x1xf32>
    %12 = arith.divf %10, %11 : vector<32x1xf32>
    %13 = vector.broadcast %12 : vector<32x1xf32> to vector<32x32xf32>
    %14 = arith.subf %8, %13 : vector<32x32xf32>
    %15 = arith.mulf %14, %14 : vector<32x32xf32>
    %cst_9 = arith.constant dense<0.000000e+00> : vector<32xf32>
    %16 = vector.multi_reduction <add>, %15, %cst_9 [1] : vector<32x32xf32> to vector<32xf32>
    %17 = vector.shape_cast %16 : vector<32xf32> to vector<32x1xf32>
    %cst_10 = arith.constant 3.200000e+01 : f32
    %18 = vector.broadcast %cst_10 : f32 to vector<32x1xf32>
    %19 = arith.divf %17, %18 : vector<32x1xf32>
    %cst_11 = arith.constant 9.99999996E-13 : f32
    %20 = vector.broadcast %cst_11 : f32 to vector<32x1xf32>
    %21 = arith.addf %19, %20 : vector<32x1xf32>
    %22 = math.rsqrt %21 : vector<32x1xf32>
    %23 = vector.broadcast %22 : vector<32x1xf32> to vector<32x32xf32>
    %24 = arith.mulf %14, %23 : vector<32x32xf32>
    %c0_12 = arith.constant 0 : index
    %c0_13 = arith.constant 0 : index
    %25 = vector.load %arg5[%c0_12, %c0_13] : memref<1x32xf32, #tpu.memory_space<vmem>>, vector<1x32xf32>
    %26 = vector.broadcast %25 : vector<1x32xf32> to vector<32x32xf32>
    %27 = arith.mulf %26, %24 : vector<32x32xf32>
    %c0_14 = arith.constant 0 : index
    %c0_15 = arith.constant 0 : index
    %28 = vector.load %arg6[%c0_14, %c0_15] : memref<1x32xf32, #tpu.memory_space<vmem>>, vector<1x32xf32>
    %29 = vector.broadcast %28 : vector<1x32xf32> to vector<32x32xf32>
    %30 = arith.addf %27, %29 : vector<32x32xf32>
    %c0_16 = arith.constant 0 : index
    %c0_17 = arith.constant 0 : index
    %31 = vector.load %arg7[%c0_16, %c0_17] : memref<32x32xf32, #tpu.memory_space<vmem>>, vector<32x32xf32>
    tpu.vector_store %arg7[%c0_16, %c0_17], %30 {strides = array<i32>} : memref<32x32xf32, #tpu.memory_space<vmem>>, vector<32x32xf32>,
    return
  }
  func.func @transform_0(%arg0: i32) -> (i32, i32) {
    %c0_i32 = arith.constant 0 : i32
    %c0_i32_0 = arith.constant 0 : i32
    return %arg0, %c0_i32 : i32, i32
  }
  func.func @transform_1(%arg0: i32) -> (i32, i32) {
    %c0_i32 = arith.constant 0 : i32
    %c0_i32_0 = arith.constant 0 : i32
    return %arg0, %c0_i32 : i32, i32
  }
  func.func @transform_2(%arg0: i32) -> (i32, i32) {
    %c0_i32 = arith.constant 0 : i32
    %c0_i32_0 = arith.constant 0 : i32
    %c0_i32_1 = arith.constant 0 : i32
    return %c0_i32, %c0_i32_0 : i32, i32
  }
  func.func @transform_3(%arg0: i32) -> (i32, i32) {
    %c0_i32 = arith.constant 0 : i32
    %c0_i32_0 = arith.constant 0 : i32
    %c0_i32_1 = arith.constant 0 : i32
    return %c0_i32, %c0_i32_0 : i32, i32
  }
  func.func @transform_4(%arg0: i32) -> (i32, i32) {
    %c0_i32 = arith.constant 0 : i32
    %c0_i32_0 = arith.constant 0 : i32
    %c0_i32_1 = arith.constant 0 : i32
    return %c0_i32, %c0_i32_0 : i32, i32
  }
  func.func @transform_5(%arg0: i32) -> (i32, i32) {
    %c0_i32 = arith.constant 0 : i32
    %c0_i32_0 = arith.constant 0 : i32
    %c0_i32_1 = arith.constant 0 : i32
    return %c0_i32, %c0_i32_0 : i32, i32
  }
  func.func @transform_6(%arg0: i32) -> (i32, i32) {
    %c0_i32 = arith.constant 0 : i32
    %c0_i32_0 = arith.constant 0 : i32
    return %arg0, %c0_i32 : i32, i32
  }
}

</mosaic_0001>

<llo_original>
// kernel: tpu_custom_call.1
$region0: #{tpu_custom_call.1}
  #allocation0 [shape = 'u32[]', space=smem, size = 0x4, offset = 0x4, fixed_abs, tag = 'smem constant byte address 0x4 - core index']
  #allocation1 [shape = 'u32[144,128]{1,0:T(1,128)}', space=vmem, size = 0x12000, scoped, tag = 'internal scratch']
  %s0 = inlined_call_operand.hbm [shape: f32[32,32], index: 0, kind: input, shape index: {}]
  %s1 = inlined_call_operand.hbm [shape: f32[32,32], index: 1, kind: input, shape index: {}]
  %s2 = inlined_call_operand.hbm [shape: bf16[32,32], index: 2, kind: input, shape index: {}]
  %s3 = inlined_call_operand.vmem [shape: f32[1,32], index: 3, kind: input, shape index: {}]
  %s4 = inlined_call_operand.vmem [shape: f32[1,32], index: 4, kind: input, shape index: {}]
  %s5 = inlined_call_operand.vmem [shape: f32[1,32], index: 5, kind: input, shape index: {}]
  %s6 = inlined_call_operand.hbm [shape: f32[32,32], index: 6, kind: output, shape index: {}]
  %s7 = sld [smem:[#allocation0]]
  $region46: #{tpu_custom_call.1} parent=0
    _
  %s9 = ssub.s32 1, %s7
  %s10 = scalar_select 0, %s9, %s7
  $region1: #{tpu_custom_call.1} parent=0
    #allocation2 [shape = 'u8[16384]{0}', space=vmem, size = 0x4000, scoped, tag = 'input window, operand 0, single buffered']
    #allocation3 [shape = 's32[1]{0}', space=sflag, size = 0x4, scoped, tag = 'scoped memory for tpu_custom_call.1']
    #allocation4 [shape = 's32[1]{0}', space=sflag, size = 0x4, scoped, tag = 'scoped memory for tpu_custom_call.1']
    #allocation5 [shape = 'u8[16384]{0}', space=vmem, size = 0x4000, scoped, tag = 'input window, operand 1, single buffered']
    #allocation6 [shape = 's32[1]{0}', space=sflag, size = 0x4, scoped, tag = 'scoped memory for tpu_custom_call.1']
    #allocation7 [shape = 'u8[8192]{0}', space=vmem, size = 0x2000, scoped, tag = 'input window, operand 2, single buffered']
    #allocation8 [shape = 'u8[16384]{0}', space=vmem, size = 0x4000, scoped, tag = 'output window, operand 0, single buffered']
    %11 = vsyncpa [#allocation3], 0
    %12 = vsyncpa [#allocation6], 0
    %13 = vsyncpa [#allocation4], 0
    // Predicated region
    $region2: #{tpu_custom_call.1} parent=1 // pred_check
      _
    $region3: #{tpu_custom_call.1} parent=1 // pred_check_branch
      %15 = sbr.rel (0) target = $region5
    $region4: #{tpu_custom_call.1} parent=1 // pred_region
      %s17 = ssub.s32 512, 512
      %18 = vsyncadd [#allocation3], %s17
      %s19 = sshll.u32 [#allocation2], 4
      %s20 = int_to_ptr.vmem [resolvable:$true] %s19
      %25 = dma.hbm_to_vmem [thread:$0]  %s0, 512, %s20, [#allocation3], 128, 128, 8
    $region5: #{tpu_custom_call.1} parent=1 // pred_fallthru
      _
    // Predicated region
    $region6: #{tpu_custom_call.1} parent=1 // pred_check
      _
    $region7: #{tpu_custom_call.1} parent=1 // pred_check_branch
      %27 = sbr.rel (0) target = $region9
    $region8: #{tpu_custom_call.1} parent=1 // pred_region
      %s29 = ssub.s32 512, 512
      %30 = vsyncadd [#allocation6], %s29
      %s31 = sshll.u32 [#allocation5], 4
      %s32 = int_to_ptr.vmem [resolvable:$true] %s31
      %37 = dma.hbm_to_vmem [thread:$0]  %s1, 512, %s32, [#allocation6], 128, 128, 8
    $region9: #{tpu_custom_call.1} parent=1 // pred_fallthru
      _
    // Predicated region
    $region10: #{tpu_custom_call.1} parent=1 // pred_check
      _
    $region11: #{tpu_custom_call.1} parent=1 // pred_check_branch
      %39 = sbr.rel (0) target = $region13
    $region12: #{tpu_custom_call.1} parent=1 // pred_region
      %s41 = ssub.s32 256, 256
      %42 = vsyncadd [#allocation6], %s41
      %s43 = sshll.u32 [#allocation7], 4
      %s44 = int_to_ptr.vmem [resolvable:$true] %s43
      %49 = dma.hbm_to_vmem [thread:$0]  %s2, 256, %s44, [#allocation6], 64, 64, 4
    $region13: #{tpu_custom_call.1} parent=1 // pred_fallthru
      _
    // Predicated region
    $region14: #{tpu_custom_call.1} parent=1 // pred_check
      _
    $region15: #{tpu_custom_call.1} parent=1 // pred_check_branch
      %51 = sbr.rel (0) target = $region17
    $region16: #{tpu_custom_call.1} parent=1 // pred_region
      _
    $region17: #{tpu_custom_call.1} parent=1 // pred_fallthru
      _
    // Predicated region
    $region18: #{tpu_custom_call.1} parent=1 // pred_check
      _
    $region19: #{tpu_custom_call.1} parent=1 // pred_check_branch
      %53 = sbr.rel (0) target = $region21
    $region20: #{tpu_custom_call.1} parent=1 // pred_region
      _
    $region21: #{tpu_custom_call.1} parent=1 // pred_fallthru
      _
    // Predicated region
    $region22: #{tpu_custom_call.1} parent=1 // pred_check
      _
    $region23: #{tpu_custom_call.1} parent=1 // pred_check_branch
      %55 = sbr.rel (0) target = $region25
    $region24: #{tpu_custom_call.1} parent=1 // pred_region
      _
    $region25: #{tpu_custom_call.1} parent=1 // pred_fallthru
      _
    // Predicated region
    $region26: #{tpu_custom_call.1} parent=1 // pred_check
      _
    $region27: #{tpu_custom_call.1} parent=1 // pred_check_branch
      %57 = sbr.rel (0) target = $region29
    $region28: #{tpu_custom_call.1} parent=1 // pred_region
      %58 = dma.done [#allocation3], 512
    $region29: #{tpu_custom_call.1} parent=1 // pred_fallthru
      _
    // Predicated region
    $region30: #{tpu_custom_call.1} parent=1 // pred_check
      _
    $region31: #{tpu_custom_call.1} parent=1 // pred_check_branch
      %60 = sbr.rel (0) target = $region33
    $region32: #{tpu_custom_call.1} parent=1 // pred_region
      %61 = dma.done [#allocation6], 512
    $region33: #{tpu_custom_call.1} parent=1 // pred_fallthru
      _
    // Predicated region
    $region34: #{tpu_custom_call.1} parent=1 // pred_check
      _
    $region35: #{tpu_custom_call.1} parent=1 // pred_check_branch
      %63 = sbr.rel (0) target = $region37
    $region36: #{tpu_custom_call.1} parent=1 // pred_region
      %64 = dma.done [#allocation6], 256
    $region37: #{tpu_custom_call.1} parent=1 // pred_fallthru
      _
    %v66 = vld [vmem:[#allocation2] sm:$0xff]
    %v67 = vld [vmem:[#allocation2 + $0x8] sm:$0xff]
    %v68 = vld [vmem:[#allocation2 + $0x10] sm:$0xff]
    %v69 = vld [vmem:[#allocation2 + $0x18] sm:$0xff]
    %v70 = vpack.c.bf16 %v67, %v66
    %v71 = vpack.c.bf16 %v69, %v68
    %v72 = vld [vmem:[#allocation7] sm:$0xf]
    %v73 = vld [vmem:[#allocation7 + $0x4] sm:$0xf]
    %v74 = vld [vmem:[#allocation7 + $0x8] sm:$0xf]
    %v75 = vld [vmem:[#allocation7 + $0xc] sm:$0xf]
    %v76 = vld [vmem:[%s3] sm:$0x1]
    %v78 = vlaneseq
    %v79 = vshrl.u32 %v78, 7
    %v80 = vsub.s32 0, %v79
    %v81 = vrot.slane %v76, %v80
    %v87 = vunpack.c.l.b16 %v72
    %v88 = vunpack.c.l.b16 %v73
    %v89 = vunpack.c.l.b16 %v74
    %v90 = vunpack.c.l.b16 %v75
    %v91 = vpack.c.b16 %v88, %v87
    %v92 = vpack.c.b16 %v90, %v89
    %vm95 = vcmask 261120
    %v97 = vsel %vm95, %v70, 0
    %v100 = vsel %vm95, %v71, 0
    %102 = vmatprep.subr.bf16.mxu0 0
    %103 = vmatpush1.bf16.msra.mxu0 %v91
    %104 = vmatprep.subr.bf16.mxu0 0
    %105 = vmatpush1.bf16.msra.mxu0 %v92
    %106 = vmatprep.subr.bf16.mxu0 0
    %107 = vmatpush1.bf16.msra.mxu0 0
    %108 = vmatprep.subr.bf16.mxu0 0
    %109 = vmatpush1.bf16.msra.mxu0 0
    %110 = vmatprep.subr.bf16.mxu0 0
    %111 = vmatpush1.bf16.msra.mxu0 0
    %112 = vmatprep.subr.bf16.mxu0 0
    %113 = vmatpush1.bf16.msra.mxu0 0
    %114 = vmatprep.subr.bf16.mxu0 0
    %115 = vmatpush1.bf16.msra.mxu0 0
    %116 = vmatprep.subr.bf16.mxu0 0
    %117 = vmatpush1.bf16.msra.mxu0 0
    %118 = vmatprep.subr.bf16.mxu0 0
    %119 = vmatpush1.bf16.msra.mxu0 0
    %120 = vmatprep.subr.bf16.mxu0 0
    %121 = vmatpush1.bf16.msra.mxu0 0
    %122 = vmatprep.subr.bf16.mxu0 0
    %123 = vmatpush1.bf16.msra.mxu0 0
    %124 = vmatprep.subr.bf16.mxu0 0
    %125 = vmatpush1.bf16.msra.mxu0 0
    %126 = vmatprep.subr.bf16.mxu0 0
    %127 = vmatpush1.bf16.msra.mxu0 0
    %128 = vmatprep.subr.bf16.mxu0 0
    %129 = vmatpush1.bf16.msra.mxu0 0
    %130 = vmatprep.subr.bf16.mxu0 0
    %131 = vmatpush1.bf16.msra.mxu0 0
    %132 = vmatprep.subr.bf16.mxu0 0
    %133 = vmatpush1.bf16.msra.mxu0 0
    %134 = vmatprep.mubr.bf16.mxu0 0
    %135 = vmatmul.mubr.bf16.gmra.mrb[0].mxu0 %v97
    %v136 = vpop.f32.mrb[0].mxu0
    %v137 = vadd.f32 %v81, %v136
    %v138 = vpop.f32.mrb[0].mxu0
    %v139 = vpop.f32.mrb[0].mxu0
    %v140 = vadd.f32 %v81, %v139
    %v141 = vpop.f32.mrb[0].mxu0
    %142 = vmatprep.mubr.bf16.mxu0 0
    %143 = vmatmul.mubr.bf16.gmra.mrb[0].mxu0 %v100
    %v144 = vpop.f32.mrb[0].mxu0
    %v145 = vadd.f32 %v81, %v144
    %v146 = vpop.f32.mrb[0].mxu0
    %v147 = vpop.f32.mrb[0].mxu0
    %v148 = vadd.f32 %v81, %v147
    %v149 = vpop.f32.mrb[0].mxu0
    %150 = vdwg.mxu0
    %v151 = vld [vmem:[#allocation5] sm:$0xff]
    %v152 = vld [vmem:[#allocation5 + $0x8] sm:$0xff]
    %v153 = vld [vmem:[#allocation5 + $0x10] sm:$0xff]
    %v154 = vld [vmem:[#allocation5 + $0x18] sm:$0xff]
    %v155 = vadd.f32 %v137, %v151
    %v156 = vadd.f32 %v140, %v152
    %v157 = vadd.f32 %v145, %v153
    %v158 = vadd.f32 %v148, %v154
    %v159 = vsel %vm95, %v155, 0.0
    %160 = vadd.xlane.f32.xlu0 %v159
    %v161 = vpop.xlane.xlu0 %160
    %v162 = vsel %vm95, %v156, 0.0
    %163 = vadd.xlane.f32.xlu0 %v162
    %v164 = vpop.xlane.xlu0 %163
    %v165 = vsel %vm95, %v157, 0.0
    %166 = vadd.xlane.f32.xlu0 %v165
    %v167 = vpop.xlane.xlu0 %166
    %v168 = vsel %vm95, %v158, 0.0
    %169 = vadd.xlane.f32.xlu0 %v168
    %v170 = vpop.xlane.xlu0 %169
    %v171 = vrcp.pop 32.0
    %v172 = vmul.f32 %v161, %v171
    %v173 = vmul.f32 %v164, %v171
    %v174 = vmul.f32 %v167, %v171
    %v175 = vmul.f32 %v170, %v171
    %v176 = vsub.f32 %v155, %v172
    %v177 = vsub.f32 %v156, %v173
    %v178 = vsub.f32 %v157, %v174
    %v179 = vsub.f32 %v158, %v175
    %v180 = vmul.f32 %v176, %v176
    %v181 = vmul.f32 %v177, %v177
    %v182 = vmul.f32 %v178, %v178
    %v183 = vmul.f32 %v179, %v179
    %v184 = vsel %vm95, %v180, 0.0
    %185 = vadd.xlane.f32.xlu0 %v184
    %v186 = vpop.xlane.xlu0 %185
    %v187 = vsel %vm95, %v181, 0.0
    %188 = vadd.xlane.f32.xlu0 %v187
    %v189 = vpop.xlane.xlu0 %188
    %v190 = vsel %vm95, %v182, 0.0
    %191 = vadd.xlane.f32.xlu0 %v190
    %v192 = vpop.xlane.xlu0 %191
    %v193 = vsel %vm95, %v183, 0.0
    %194 = vadd.xlane.f32.xlu0 %v193
    %v195 = vpop.xlane.xlu0 %194
    %v196 = vmul.f32 %v186, %v171
    %v197 = vmul.f32 %v189, %v171
    %v198 = vmul.f32 %v192, %v171
    %v199 = vmul.f32 %v195, %v171
    %v200 = vadd.f32 %v196, 1e-12
    %v201 = vadd.f32 %v197, 1e-12
    %v202 = vadd.f32 %v198, 1e-12
    %v203 = vadd.f32 %v199, 1e-12
    %v204 = vrsqrt.pop %v200
    %v205 = vrsqrt.pop %v201
    %v206 = vrsqrt.pop %v202
    %v207 = vrsqrt.pop %v203
    %v208 = vmul.f32 %v176, %v204
    %v209 = vmul.f32 %v177, %v205
    %v210 = vmul.f32 %v178, %v206
    %v211 = vmul.f32 %v179, %v207
    %v212 = vld [vmem:[%s4] sm:$0x1]
    %v214 = vlaneseq
    %v215 = vshrl.u32 %v214, 7
    %v216 = vsub.s32 0, %v215
    %v217 = vrot.slane %v212, %v216
    %v219 = vmul.f32 %v217, %v208
    %v220 = vmul.f32 %v217, %v209
    %v221 = vmul.f32 %v217, %v210
    %v222 = vmul.f32 %v217, %v211
    %v223 = vld [vmem:[%s5] sm:$0x1]
    %v225 = vlaneseq
    %v226 = vshrl.u32 %v225, 7
    %v227 = vsub.s32 0, %v226
    %v228 = vrot.slane %v223, %v227
    %v230 = vadd.f32 %v219, %v228
    %v231 = vadd.f32 %v220, %v228
    %v232 = vadd.f32 %v221, %v228
    %v233 = vadd.f32 %v222, %v228
    %234 = vst.msk [vmem:[#allocation8] sm:$0xff] %vm95, %v230
    %235 = vst.msk [vmem:[#allocation8 + $0x8] sm:$0xff] %vm95, %v231
    %236 = vst.msk [vmem:[#allocation8 + $0x10] sm:$0xff] %vm95, %v232
    %237 = vst.msk [vmem:[#allocation8 + $0x18] sm:$0xff] %vm95, %v233
    // Predicated region
    $region38: #{tpu_custom_call.1} parent=1 // pred_check
      _
    $region39: #{tpu_custom_call.1} parent=1 // pred_check_branch
      %239 = sbr.rel (0) target = $region41
    $region40: #{tpu_custom_call.1} parent=1 // pred_region
      %s241 = ssub.s32 512, 512
      %242 = vsyncadd [#allocation4], %s241
      %s243 = sshll.u32 [#allocation8], 4
      %s244 = int_to_ptr.vmem [resolvable:$true] %s243
      %249 = dma.vmem_to_hbm [thread:$0]  %s244, 512, %s6, [#allocation4], 128, 128, 8
    $region41: #{tpu_custom_call.1} parent=1 // pred_fallthru
      _
    // Predicated region
    $region42: #{tpu_custom_call.1} parent=1 // pred_check
      _
    $region43: #{tpu_custom_call.1} parent=1 // pred_check_branch
      %251 = sbr.rel (0) target = $region45
    $region44: #{tpu_custom_call.1} parent=1 // pred_region
      %252 = dma.done [#allocation4], 512
    $region45: #{tpu_custom_call.1} parent=1 // pred_fallthru
      _
    %253 = vsyncpa [#allocation3], 1
    %254 = vsyncpa [#allocation6], 1
    %255 = vsyncpa [#allocation4], 1

</llo_original>
